<compile_context>
chip_gen: v5e
topology: v5e:2x2
jax: 0.10.0
libtpu: 0.0.40
codegen_flags: <defaults>
</compile_context>

<pallas_src>
import jax
import jax.numpy as jnp
from jax.experimental import pallas as pl
from jax.experimental.pallas import tpu as pltpu


def _vanilla_rnn_kernel(x_ref, h0_ref, wih_ref, whh_ref, bias_ref, out_ref):
    """Fused input projection + serial Elman recurrence, single invocation.

    x_ref   : (B, T, I) f32  batch-first inputs                    (VMEM)
    h0_ref  : (B, H)    f32  initial hidden state                  (VMEM)
    wih_ref : (I, H)    f32  W_ih.T                                (VMEM)
    whh_ref : (H, H)    f32  W_hh.T                                (VMEM)
    bias_ref: (1, H)    f32  b_ih + b_hh                           (VMEM)
    out_ref : (B, T*H)       hidden states, lane-dense slab        (VMEM)
    """
    B, T, I = x_ref.shape
    H = whh_ref.shape[0]

    # Constants loaded once; they live in vregs for the whole kernel.
    wih = wih_ref[...]            # (I, H)
    whh = whh_ref[...]            # (H, H)
    bias = bias_ref[...]          # (1, H)

    # Input projection for ALL timesteps: one matmul, independent of the
    # recurrence, so it sits off the serial critical path.  The reshapes only
    # merge/split leading dims (sublane-tile aligned) -> layout no-ops.
    x2d = x_ref[...].reshape(B * T, I)                                  # (B*T, I)
    xw = jnp.dot(x2d, wih, preferred_element_type=jnp.float32) + bias  # (B*T, H)
    xw = xw.reshape(B, T, H)

    # Serial recurrence, fully unrolled (T small & static; `t` is a Python int
    # so every slice is static).  Only dot -> add -> tanh is on the dependent
    # chain; h is carried in vregs, never round-tripped through VMEM scratch.
    h = h0_ref[...]
    hs = []
    for t in range(T):
        pre = xw[:, t, :] + jnp.dot(h, whh, preferred_element_type=jnp.float32)
        h = jnp.tanh(pre)         # EUP slot — effectively free vs. the MXU chain
        hs.append(h)

    # Single lane-dense store: (B, T*H) with T*H a multiple of 128 lanes ->
    # unmasked vst, instead of T masked 32-lane stores interleaved with the
    # recurrence.
    out_ref[...] = jnp.concatenate(hs, axis=-1).astype(out_ref.dtype)


def prepare_rnn_params(W_ih, b_ih, W_hh, b_hh):
    """One-time parameter layout prep (pre-transposed weights, fused bias)."""
    f32 = jnp.float32
    return {
        "w_ih_t": jnp.asarray(W_ih, f32).T,                 # (I, H)
        "w_hh_t": jnp.asarray(W_hh, f32).T,                 # (H, H)
        "bias": (jnp.asarray(b_ih, f32)
                 + jnp.asarray(b_hh, f32)).reshape(1, -1),  # (1, H)
    }


def vanilla_rnn_forward(x, hidden_and_cell, params):
    """x: (B, T, I) float32 (batch_first=True). Returns ((B, T, H), None)."""
    h0 = hidden_and_cell[0][0]        # layer-0 hidden state; cell state unused
    B, T, I = x.shape
    H = params["w_hh_t"].shape[0]

    out_flat = pl.pallas_call(
        _vanilla_rnn_kernel,
        out_shape=jax.ShapeDtypeStruct((B, T * H), x.dtype),
        # Single invocation, no grid: whole problem is VMEM-resident; every
        # operand is DMA'd exactly once.
        in_specs=[
            pl.BlockSpec(memory_space=pltpu.MemorySpace.VMEM),  # x
            pl.BlockSpec(memory_space=pltpu.MemorySpace.VMEM),  # h0
            pl.BlockSpec(memory_space=pltpu.MemorySpace.VMEM),  # W_ih.T
            pl.BlockSpec(memory_space=pltpu.MemorySpace.VMEM),  # W_hh.T
            pl.BlockSpec(memory_space=pltpu.MemorySpace.VMEM),  # bias
        ],
        out_specs=pl.BlockSpec(memory_space=pltpu.MemorySpace.VMEM),
    )(x, h0, params["w_ih_t"], params["w_hh_t"], params["bias"])

    # (B, T*H) -> (B, T, H): row-major compatible, metadata-only reshape.
    return out_flat.reshape(B, T, H), None


def _xavier_uniform(key, shape, dtype=jnp.float32):
    fan_out, fan_in = shape
    limit = jnp.sqrt(6.0 / (fan_in + fan_out))
    return jax.random.uniform(key, shape, dtype, minval=-limit, maxval=limit)


def _reference_forward(x, hidden_and_cell, W_ih, b_ih, W_hh, b_hh):
    """Pure-JAX port of the PyTorch module's forward (source of truth)."""
    h = hidden_and_cell[0][0]
    xs = jnp.transpose(x, (1, 0, 2))
    outs = []
    for t in range(xs.shape[0]):
        h = jnp.tanh(xs[t] @ W_ih.T + b_ih + h @ W_hh.T + b_hh)
        outs.append(h[None])
    return jnp.transpose(jnp.concatenate(outs, axis=0), (1, 0, 2))


if __name__ == "__main__":
    # Small shapes consistent with a sine-function predictor RNN.
    input_size = 4
    hidden_size = 32
    num_layers = 1
    batch = 2
    seq_len = 8

    key = jax.random.PRNGKey(0)
    k1, k2, k3, k4 = jax.random.split(key, 4)

    # Deterministic params (xavier_uniform weights, zero biases) — matches module init.
    W_ih = _xavier_uniform(k1, (hidden_size, input_size))
    b_ih = jnp.zeros((hidden_size,), jnp.float32)
    W_hh = _xavier_uniform(k2, (hidden_size, hidden_size))
    b_hh = jnp.zeros((hidden_size,), jnp.float32)

    # One-time layout prep (kept out of the per-call forward path).
    params = prepare_rnn_params(W_ih, b_ih, W_hh, b_hh)

    # Inputs: batch_first input and (hidden, cell) tuple; cell is unused.
    x = jax.random.normal(k3, (batch, seq_len, input_size), jnp.float32)
    h0 = jax.random.normal(k4, (num_layers, batch, hidden_size), jnp.float32)
    hidden_and_cell = (h0, None)

    out, second = vanilla_rnn_forward(x, hidden_and_cell, params)
    out = jax.block_until_ready(out)

    ref = _reference_forward(x, hidden_and_cell, W_ih, b_ih, W_hh, b_hh)
    assert second is None
    assert out.shape == (batch, seq_len, hidden_size)
    assert jnp.allclose(out, ref, atol=1e-5, rtol=1e-5)

    print("KERNEL_OK")
</pallas_src>

<mosaic_0001>
module attributes {stable_mosaic.version = 11 : i64} {
  func.func @_vanilla_rnn_kernel(%arg0: memref<2x8x4xf32, #tpu.memory_space<vmem>>, %arg1: memref<2x32xf32, #tpu.memory_space<vmem>>, %arg2: memref<4x32xf32, #tpu.memory_space<vmem>>, %arg3: memref<32x32xf32, #tpu.memory_space<vmem>>, %arg4: memref<1x32xf32, #tpu.memory_space<vmem>>, %arg5: memref<2x256xf32, #tpu.memory_space<vmem>>) attributes {dimension_semantics = [], scalar_prefetch = 0 : i64, scratch_operands = 0 : i64, tpu.core_type = #tpu.core_type<tc>} {
    %c0 = arith.constant 0 : index
    %c0_0 = arith.constant 0 : index
    %0 = vector.load %arg2[%c0, %c0_0] : memref<4x32xf32, #tpu.memory_space<vmem>>, vector<4x32xf32>
    %c0_1 = arith.constant 0 : index
    %c0_2 = arith.constant 0 : index
    %1 = vector.load %arg3[%c0_1, %c0_2] : memref<32x32xf32, #tpu.memory_space<vmem>>, vector<32x32xf32>
    %c0_3 = arith.constant 0 : index
    %c0_4 = arith.constant 0 : index
    %2 = vector.load %arg4[%c0_3, %c0_4] : memref<1x32xf32, #tpu.memory_space<vmem>>, vector<1x32xf32>
    %c0_5 = arith.constant 0 : index
    %c0_6 = arith.constant 0 : index
    %c0_7 = arith.constant 0 : index
    %3 = vector.load %arg0[%c0_5, %c0_6, %c0_7] : memref<2x8x4xf32, #tpu.memory_space<vmem>>, vector<2x8x4xf32>
    %4 = vector.shape_cast %3 : vector<2x8x4xf32> to vector<16x4xf32>
    %cst = arith.constant dense<0.000000e+00> : vector<16x32xf32>
    %5 = tpu.matmul %4, %0, %cst {dimension_numbers = #tpu.dot_dimension_numbers<[1], [0], [0], [1], [0, 0, 1, 1], [], []>} : vector<16x4xf32>, vector<4x32xf32>, vector<16x32xf32> -> vector<16x32xf32>
    %6 = vector.broadcast %2 : vector<1x32xf32> to vector<16x32xf32>
    %7 = arith.addf %5, %6 : vector<16x32xf32>
    %8 = vector.shape_cast %7 : vector<16x32xf32> to vector<2x8x32xf32>
    %c0_8 = arith.constant 0 : index
    %c0_9 = arith.constant 0 : index
    %9 = vector.load %arg1[%c0_8, %c0_9] : memref<2x32xf32, #tpu.memory_space<vmem>>, vector<2x32xf32>
    %10 = vector.extract_strided_slice %8 {offsets = [0, 0, 0], sizes = [2, 1, 32], strides = [1, 1, 1]} : vector<2x8x32xf32> to vector<2x1x32xf32>
    %11 = vector.shape_cast %10 : vector<2x1x32xf32> to vector<2x32xf32>
    %cst_10 = arith.constant dense<0.000000e+00> : vector<2x32xf32>
    %12 = tpu.matmul %9, %1, %cst_10 {dimension_numbers = #tpu.dot_dimension_numbers<[1], [0], [0], [1], [0, 0, 1, 1], [], []>} : vector<2x32xf32>, vector<32x32xf32>, vector<2x32xf32> -> vector<2x32xf32>
    %13 = arith.addf %11, %12 : vector<2x32xf32>
    %14 = math.tanh %13 : vector<2x32xf32>
    %15 = vector.extract_strided_slice %8 {offsets = [0, 1, 0], sizes = [2, 1, 32], strides = [1, 1, 1]} : vector<2x8x32xf32> to vector<2x1x32xf32>
    %16 = vector.shape_cast %15 : vector<2x1x32xf32> to vector<2x32xf32>
    %cst_11 = arith.constant dense<0.000000e+00> : vector<2x32xf32>
    %17 = tpu.matmul %14, %1, %cst_11 {dimension_numbers = #tpu.dot_dimension_numbers<[1], [0], [0], [1], [0, 0, 1, 1], [], []>} : vector<2x32xf32>, vector<32x32xf32>, vector<2x32xf32> -> vector<2x32xf32>
    %18 = arith.addf %16, %17 : vector<2x32xf32>
    %19 = math.tanh %18 : vector<2x32xf32>
    %20 = vector.extract_strided_slice %8 {offsets = [0, 2, 0], sizes = [2, 1, 32], strides = [1, 1, 1]} : vector<2x8x32xf32> to vector<2x1x32xf32>
    %21 = vector.shape_cast %20 : vector<2x1x32xf32> to vector<2x32xf32>
    %cst_12 = arith.constant dense<0.000000e+00> : vector<2x32xf32>
    %22 = tpu.matmul %19, %1, %cst_12 {dimension_numbers = #tpu.dot_dimension_numbers<[1], [0], [0], [1], [0, 0, 1, 1], [], []>} : vector<2x32xf32>, vector<32x32xf32>, vector<2x32xf32> -> vector<2x32xf32>
    %23 = arith.addf %21, %22 : vector<2x32xf32>
    %24 = math.tanh %23 : vector<2x32xf32>
    %25 = vector.extract_strided_slice %8 {offsets = [0, 3, 0], sizes = [2, 1, 32], strides = [1, 1, 1]} : vector<2x8x32xf32> to vector<2x1x32xf32>
    %26 = vector.shape_cast %25 : vector<2x1x32xf32> to vector<2x32xf32>
    %cst_13 = arith.constant dense<0.000000e+00> : vector<2x32xf32>
    %27 = tpu.matmul %24, %1, %cst_13 {dimension_numbers = #tpu.dot_dimension_numbers<[1], [0], [0], [1], [0, 0, 1, 1], [], []>} : vector<2x32xf32>, vector<32x32xf32>, vector<2x32xf32> -> vector<2x32xf32>
    %28 = arith.addf %26, %27 : vector<2x32xf32>
    %29 = math.tanh %28 : vector<2x32xf32>
    %30 = vector.extract_strided_slice %8 {offsets = [0, 4, 0], sizes = [2, 1, 32], strides = [1, 1, 1]} : vector<2x8x32xf32> to vector<2x1x32xf32>
    %31 = vector.shape_cast %30 : vector<2x1x32xf32> to vector<2x32xf32>
    %cst_14 = arith.constant dense<0.000000e+00> : vector<2x32xf32>
    %32 = tpu.matmul %29, %1, %cst_14 {dimension_numbers = #tpu.dot_dimension_numbers<[1], [0], [0], [1], [0, 0, 1, 1], [], []>} : vector<2x32xf32>, vector<32x32xf32>, vector<2x32xf32> -> vector<2x32xf32>
    %33 = arith.addf %31, %32 : vector<2x32xf32>
    %34 = math.tanh %33 : vector<2x32xf32>
    %35 = vector.extract_strided_slice %8 {offsets = [0, 5, 0], sizes = [2, 1, 32], strides = [1, 1, 1]} : vector<2x8x32xf32> to vector<2x1x32xf32>
    %36 = vector.shape_cast %35 : vector<2x1x32xf32> to vector<2x32xf32>
    %cst_15 = arith.constant dense<0.000000e+00> : vector<2x32xf32>
    %37 = tpu.matmul %34, %1, %cst_15 {dimension_numbers = #tpu.dot_dimension_numbers<[1], [0], [0], [1], [0, 0, 1, 1], [], []>} : vector<2x32xf32>, vector<32x32xf32>, vector<2x32xf32> -> vector<2x32xf32>
    %38 = arith.addf %36, %37 : vector<2x32xf32>
    %39 = math.tanh %38 : vector<2x32xf32>
    %40 = vector.extract_strided_slice %8 {offsets = [0, 6, 0], sizes = [2, 1, 32], strides = [1, 1, 1]} : vector<2x8x32xf32> to vector<2x1x32xf32>
    %41 = vector.shape_cast %40 : vector<2x1x32xf32> to vector<2x32xf32>
    %cst_16 = arith.constant dense<0.000000e+00> : vector<2x32xf32>
    %42 = tpu.matmul %39, %1, %cst_16 {dimension_numbers = #tpu.dot_dimension_numbers<[1], [0], [0], [1], [0, 0, 1, 1], [], []>} : vector<2x32xf32>, vector<32x32xf32>, vector<2x32xf32> -> vector<2x32xf32>
    %43 = arith.addf %41, %42 : vector<2x32xf32>
    %44 = math.tanh %43 : vector<2x32xf32>
    %45 = vector.extract_strided_slice %8 {offsets = [0, 7, 0], sizes = [2, 1, 32], strides = [1, 1, 1]} : vector<2x8x32xf32> to vector<2x1x32xf32>
    %46 = vector.shape_cast %45 : vector<2x1x32xf32> to vector<2x32xf32>
    %cst_17 = arith.constant dense<0.000000e+00> : vector<2x32xf32>
    %47 = tpu.matmul %44, %1, %cst_17 {dimension_numbers = #tpu.dot_dimension_numbers<[1], [0], [0], [1], [0, 0, 1, 1], [], []>} : vector<2x32xf32>, vector<32x32xf32>, vector<2x32xf32> -> vector<2x32xf32>
    %48 = arith.addf %46, %47 : vector<2x32xf32>
    %49 = math.tanh %48 : vector<2x32xf32>
    %50 = tpu.concatenate %14, %19, %24, %29, %34, %39, %44, %49 in 1 : vector<2x32xf32>, vector<2x32xf32>, vector<2x32xf32>, vector<2x32xf32>, vector<2x32xf32>, vector<2x32xf32>, vector<2x32xf32>, vector<2x32xf32> -> vector<2x256xf32>
    %c0_18 = arith.constant 0 : index
    %c0_19 = arith.constant 0 : index
    %51 = vector.load %arg5[%c0_18, %c0_19] : memref<2x256xf32, #tpu.memory_space<vmem>>, vector<2x256xf32>
    tpu.vector_store %arg5[%c0_18, %c0_19], %50 {strides = array<i32>} : memref<2x256xf32, #tpu.memory_space<vmem>>, vector<2x256xf32>,
    return
  }
}

</mosaic_0001>

<llo_original>
// kernel: tpu_custom_call.1
$region0: #{tpu_custom_call.1}
  #allocation0 [shape = 'u32[]', space=smem, size = 0x4, offset = 0x4, fixed_abs, tag = 'smem constant byte address 0x4 - core index']
  #allocation1 [shape = 'u32[72,128]{1,0:T(1,128)}', space=vmem, size = 0x9000, scoped, tag = 'internal scratch']
  %s0 = inlined_call_operand.vmem [shape: f32[2,8,4], index: 0, kind: input, shape index: {}]
  %s1 = inlined_call_operand.vmem [shape: f32[2,32], index: 1, kind: input, shape index: {}]
  %s2 = inlined_call_operand.vmem [shape: f32[4,32], index: 2, kind: input, shape index: {}]
  %s3 = inlined_call_operand.hbm [shape: f32[32,32], index: 3, kind: input, shape index: {}]
  %s4 = inlined_call_operand.vmem [shape: f32[1,32], index: 4, kind: input, shape index: {}]
  %s5 = inlined_call_operand.hbm [shape: f32[2,256], index: 5, kind: output, shape index: {}]
  %s6 = sld [smem:[#allocation0]]
  $region34: #{tpu_custom_call.1} parent=0
    _
  %s8 = ssub.s32 1, %s6
  %s9 = scalar_select 0, %s8, %s6
  $region1: #{tpu_custom_call.1} parent=0
    #allocation2 [shape = 'u8[16384]{0}', space=vmem, size = 0x4000, scoped, tag = 'input window, operand 3, single buffered']
    #allocation3 [shape = 's32[1]{0}', space=sflag, size = 0x4, scoped, tag = 'scoped memory for tpu_custom_call.1']
    #allocation4 [shape = 's32[1]{0}', space=sflag, size = 0x4, scoped, tag = 'scoped memory for tpu_custom_call.1']
    #allocation5 [shape = 'u8[2048]{0}', space=vmem, size = 0x800, scoped, tag = 'output window, operand 0, single buffered']
    %10 = vsyncpa [#allocation3], 0
    %11 = vsyncpa [#allocation4], 0
    // Predicated region
    $region2: #{tpu_custom_call.1} parent=1 // pred_check
      _
    $region3: #{tpu_custom_call.1} parent=1 // pred_check_branch
      %13 = sbr.rel (0) target = $region5
    $region4: #{tpu_custom_call.1} parent=1 // pred_region
      _
    $region5: #{tpu_custom_call.1} parent=1 // pred_fallthru
      _
    // Predicated region
    $region6: #{tpu_custom_call.1} parent=1 // pred_check
      _
    $region7: #{tpu_custom_call.1} parent=1 // pred_check_branch
      %15 = sbr.rel (0) target = $region9
    $region8: #{tpu_custom_call.1} parent=1 // pred_region
      _
    $region9: #{tpu_custom_call.1} parent=1 // pred_fallthru
      _
    // Predicated region
    $region10: #{tpu_custom_call.1} parent=1 // pred_check
      _
    $region11: #{tpu_custom_call.1} parent=1 // pred_check_branch
      %17 = sbr.rel (0) target = $region13
    $region12: #{tpu_custom_call.1} parent=1 // pred_region
      _
    $region13: #{tpu_custom_call.1} parent=1 // pred_fallthru
      _
    // Predicated region
    $region14: #{tpu_custom_call.1} parent=1 // pred_check
      _
    $region15: #{tpu_custom_call.1} parent=1 // pred_check_branch
      %19 = sbr.rel (0) target = $region17
    $region16: #{tpu_custom_call.1} parent=1 // pred_region
      %21 = vsyncadd [#allocation3], 0
      %s22 = sshll.u32 %s3, 4
      %s23 = int_to_ptr.hbm [resolvable:$true] %s22
      %s24 = sshll.u32 [#allocation2], 4
      %s25 = int_to_ptr.vmem [resolvable:$true] %s24
      %30 = dma.hbm_to_vmem [thread:$0]  %s23, 512, %s25, [#allocation3], 128, 128, 8
    $region17: #{tpu_custom_call.1} parent=1 // pred_fallthru
      _
    // Predicated region
    $region18: #{tpu_custom_call.1} parent=1 // pred_check
      _
    $region19: #{tpu_custom_call.1} parent=1 // pred_check_branch
      %32 = sbr.rel (0) target = $region21
    $region20: #{tpu_custom_call.1} parent=1 // pred_region
      _
    $region21: #{tpu_custom_call.1} parent=1 // pred_fallthru
      _
    // Predicated region
    $region22: #{tpu_custom_call.1} parent=1 // pred_check
      _
    $region23: #{tpu_custom_call.1} parent=1 // pred_check_branch
      %34 = sbr.rel (0) target = $region25
    $region24: #{tpu_custom_call.1} parent=1 // pred_region
      %36 = dma.done [#allocation3], 512
    $region25: #{tpu_custom_call.1} parent=1 // pred_fallthru
      _
    %v37 = vld [vmem:[%s2] sm:$0xf]
    %v38 = vld [vmem:[#allocation2] sm:$0xff]
    %v39 = vld [vmem:[#allocation2 + $0x8] sm:$0xff]
    %v40 = vld [vmem:[#allocation2 + $0x10] sm:$0xff]
    %v41 = vld [vmem:[#allocation2 + $0x18] sm:$0xff]
    %v42 = vld [vmem:[%s4] sm:$0x1]
    %v43 = vld [vmem:[%s0] sm:$0xff]
    %v44 = vld [vmem:[%s0 + $0x8] sm:$0xff]
    %v46 = vperm.slane %v42, 0
    %vm48 = vcmask 31744
    %v50 = vsel %vm48, %v43, 0
    %v53 = vsel %vm48, %v44, 0
    %vm55 = vcmask 1043456
    %v57 = vsel %vm55, %v37, 0
    %59 = vmatpush.msra.mxu0 0.0
    %60 = vmatpush.msra.mxu0 0.0
    %61 = vmatpush.msra.mxu0 0.0
    %62 = vmatpush.msra.mxu0 0.0
    %63 = vmatpush.msra.mxu0 0.0
    %64 = vmatpush.msra.mxu0 0.0
    %65 = vmatpush.msra.mxu0 0.0
    %66 = vmatpush.msra.mxu0 0.0
    %67 = vmatpush.msra.mxu0 0.0
    %68 = vmatpush.msra.mxu0 0.0
    %69 = vmatpush.msra.mxu0 0.0
    %70 = vmatpush.msra.mxu0 0.0
    %71 = vmatpush.msra.mxu0 0.0
    %72 = vmatpush.msra.mxu0 0.0
    %73 = vmatpush.msra.mxu0 0.0
    %74 = vmatpush.msra.mxu0 %v57
    %75 = vmatmul.f32.gmra.mxu0 %v50
    %v76 = vpop.f32.mrf.mxu0
    %v77 = vadd.f32 %v46, %v76
    %78 = vmatmul.f32.gmra.mxu0 %v53
    %v79 = vpop.f32.mrf.mxu0
    %v80 = vadd.f32 %v46, %v79
    %81 = vdwg.mxu0
    %v82 = vld [vmem:[%s1] sm:$0x3]
    %vm83 = vcmask 261120
    %v85 = vsel %vm83, %v82, 0
    %87 = vmatpush.msra.mxu0 0.0
    %88 = vmatpush.msra.mxu0 0.0
    %89 = vmatpush.msra.mxu0 0.0
    %90 = vmatpush.msra.mxu0 0.0
    %91 = vmatpush.msra.mxu0 0.0
    %92 = vmatpush.msra.mxu0 0.0
    %93 = vmatpush.msra.mxu0 0.0
    %94 = vmatpush.msra.mxu0 0.0
    %95 = vmatpush.msra.mxu0 0.0
    %96 = vmatpush.msra.mxu0 0.0
    %97 = vmatpush.msra.mxu0 0.0
    %98 = vmatpush.msra.mxu0 0.0
    %99 = vmatpush.msra.mxu0 %v41
    %100 = vmatpush.msra.mxu0 %v40
    %101 = vmatpush.msra.mxu0 %v39
    %102 = vmatpush.msra.mxu0 %v38
    %103 = vmatmul.f32.gmra.mxu0 %v85
    %v104 = vpop.f32.mrf.mxu0
    %v105 = vadd.f32 0.0, %v104
    %106 = vdwg.mxu0
    %v108 = vrot.slane %v105, 1
    %v111 = vadd.f32 %v77, %v105
    %v112 = vadd.f32 %v80, %v108
    %v113 = vtanh.pop %v111
    %v114 = vtanh.pop %v112
    %v117 = vrot.slane %v114, 7
    %vm118 = vcmask 1041409
    %v119 = vsel %vm118, %v117, %v113
    %v120 = vsel %vm83, %v119, 0
    %122 = vmatpush.msra.mxu0 0.0
    %123 = vmatpush.msra.mxu0 0.0
    %124 = vmatpush.msra.mxu0 0.0
    %125 = vmatpush.msra.mxu0 0.0
    %126 = vmatpush.msra.mxu0 0.0
    %127 = vmatpush.msra.mxu0 0.0
    %128 = vmatpush.msra.mxu0 0.0
    %129 = vmatpush.msra.mxu0 0.0
    %130 = vmatpush.msra.mxu0 0.0
    %131 = vmatpush.msra.mxu0 0.0
    %132 = vmatpush.msra.mxu0 0.0
    %133 = vmatpush.msra.mxu0 0.0
    %134 = vmatpush.msra.mxu0 %v41
    %135 = vmatpush.msra.mxu0 %v40
    %136 = vmatpush.msra.mxu0 %v39
    %137 = vmatpush.msra.mxu0 %v38
    %138 = vmatmul.f32.gmra.mxu0 %v120
    %v139 = vpop.f32.mrf.mxu0
    %v140 = vadd.f32 0.0, %v139
    %141 = vdwg.mxu0
    %v143 = vrot.slane %v140, 7
    %v146 = vadd.f32 %v77, %v143
    %v147 = vadd.f32 %v80, %v140
    %v148 = vtanh.pop %v146
    %v149 = vtanh.pop %v147
    %v152 = vrot.slane %v148, 1
    %v153 = vsel %vm118, %v149, %v152
    %v154 = vsel %vm83, %v153, 0
    %156 = vmatpush.msra.mxu0 0.0
    %157 = vmatpush.msra.mxu0 0.0
    %158 = vmatpush.msra.mxu0 0.0
    %159 = vmatpush.msra.mxu0 0.0
    %160 = vmatpush.msra.mxu0 0.0
    %161 = vmatpush.msra.mxu0 0.0
    %162 = vmatpush.msra.mxu0 0.0
    %163 = vmatpush.msra.mxu0 0.0
    %164 = vmatpush.msra.mxu0 0.0
    %165 = vmatpush.msra.mxu0 0.0
    %166 = vmatpush.msra.mxu0 0.0
    %167 = vmatpush.msra.mxu0 0.0
    %168 = vmatpush.msra.mxu0 %v41
    %169 = vmatpush.msra.mxu0 %v40
    %170 = vmatpush.msra.mxu0 %v39
    %171 = vmatpush.msra.mxu0 %v38
    %172 = vmatmul.f32.gmra.mxu0 %v154
    %v173 = vpop.f32.mrf.mxu0
    %v174 = vadd.f32 0.0, %v173
    %175 = vdwg.mxu0
    %v177 = vrot.slane %v174, 6
    %v178 = vrot.slane %v174, 7
    %v181 = vadd.f32 %v77, %v177
    %v182 = vadd.f32 %v80, %v178
    %v183 = vtanh.pop %v181
    %v184 = vtanh.pop %v182
    %v187 = vrot.slane %v183, 2
    %v188 = vrot.slane %v184, 1
    %v189 = vsel %vm118, %v188, %v187
    %v190 = vsel %vm83, %v189, 0
    %192 = vmatpush.msra.mxu0 0.0
    %193 = vmatpush.msra.mxu0 0.0
    %194 = vmatpush.msra.mxu0 0.0
    %195 = vmatpush.msra.mxu0 0.0
    %196 = vmatpush.msra.mxu0 0.0
    %197 = vmatpush.msra.mxu0 0.0
    %198 = vmatpush.msra.mxu0 0.0
    %199 = vmatpush.msra.mxu0 0.0
    %200 = vmatpush.msra.mxu0 0.0
    %201 = vmatpush.msra.mxu0 0.0
    %202 = vmatpush.msra.mxu0 0.0
    %203 = vmatpush.msra.mxu0 0.0
    %204 = vmatpush.msra.mxu0 %v41
    %205 = vmatpush.msra.mxu0 %v40
    %206 = vmatpush.msra.mxu0 %v39
    %207 = vmatpush.msra.mxu0 %v38
    %208 = vmatmul.f32.gmra.mxu0 %v190
    %v209 = vpop.f32.mrf.mxu0
    %v210 = vadd.f32 0.0, %v209
    %211 = vdwg.mxu0
    %v213 = vrot.slane %v210, 5
    %v214 = vrot.slane %v210, 6
    %v217 = vadd.f32 %v77, %v213
    %v218 = vadd.f32 %v80, %v214
    %v219 = vtanh.pop %v217
    %v220 = vtanh.pop %v218
    %v223 = vrot.slane %v219, 3
    %v224 = vrot.slane %v220, 2
    %v225 = vsel %vm118, %v224, %v223
    %v226 = vsel %vm83, %v225, 0
    %228 = vmatpush.msra.mxu0 0.0
    %229 = vmatpush.msra.mxu0 0.0
    %230 = vmatpush.msra.mxu0 0.0
    %231 = vmatpush.msra.mxu0 0.0
    %232 = vmatpush.msra.mxu0 0.0
    %233 = vmatpush.msra.mxu0 0.0
    %234 = vmatpush.msra.mxu0 0.0
    %235 = vmatpush.msra.mxu0 0.0
    %236 = vmatpush.msra.mxu0 0.0
    %237 = vmatpush.msra.mxu0 0.0
    %238 = vmatpush.msra.mxu0 0.0
    %239 = vmatpush.msra.mxu0 0.0
    %240 = vmatpush.msra.mxu0 %v41
    %241 = vmatpush.msra.mxu0 %v40
    %242 = vmatpush.msra.mxu0 %v39
    %243 = vmatpush.msra.mxu0 %v38
    %244 = vmatmul.f32.gmra.mxu0 %v226
    %v245 = vpop.f32.mrf.mxu0
    %v246 = vadd.f32 0.0, %v245
    %247 = vdwg.mxu0
    %v249 = vrot.slane %v246, 4
    %v250 = vrot.slane %v246, 5
    %v253 = vadd.f32 %v77, %v249
    %v254 = vadd.f32 %v80, %v250
    %v255 = vtanh.pop %v253
    %v256 = vtanh.pop %v254
    %v259 = vrot.slane %v255, 4
    %v260 = vrot.slane %v256, 3
    %v261 = vsel %vm118, %v260, %v259
    %v262 = vsel %vm83, %v261, 0
    %264 = vmatpush.msra.mxu0 0.0
    %265 = vmatpush.msra.mxu0 0.0
    %266 = vmatpush.msra.mxu0 0.0
    %267 = vmatpush.msra.mxu0 0.0
    %268 = vmatpush.msra.mxu0 0.0
    %269 = vmatpush.msra.mxu0 0.0
    %270 = vmatpush.msra.mxu0 0.0
    %271 = vmatpush.msra.mxu0 0.0
    %272 = vmatpush.msra.mxu0 0.0
    %273 = vmatpush.msra.mxu0 0.0
    %274 = vmatpush.msra.mxu0 0.0
    %275 = vmatpush.msra.mxu0 0.0
    %276 = vmatpush.msra.mxu0 %v41
    %277 = vmatpush.msra.mxu0 %v40
    %278 = vmatpush.msra.mxu0 %v39
    %279 = vmatpush.msra.mxu0 %v38
    %280 = vmatmul.f32.gmra.mxu0 %v262
    %v281 = vpop.f32.mrf.mxu0
    %v282 = vadd.f32 0.0, %v281
    %283 = vdwg.mxu0
    %v285 = vrot.slane %v282, 3
    %v286 = vrot.slane %v282, 4
    %v289 = vadd.f32 %v77, %v285
    %v290 = vadd.f32 %v80, %v286
    %v291 = vtanh.pop %v289
    %v292 = vtanh.pop %v290
    %v295 = vrot.slane %v291, 5
    %v296 = vrot.slane %v292, 4
    %v297 = vsel %vm118, %v296, %v295
    %v298 = vsel %vm83, %v297, 0
    %300 = vmatpush.msra.mxu0 0.0
    %301 = vmatpush.msra.mxu0 0.0
    %302 = vmatpush.msra.mxu0 0.0
    %303 = vmatpush.msra.mxu0 0.0
    %304 = vmatpush.msra.mxu0 0.0
    %305 = vmatpush.msra.mxu0 0.0
    %306 = vmatpush.msra.mxu0 0.0
    %307 = vmatpush.msra.mxu0 0.0
    %308 = vmatpush.msra.mxu0 0.0
    %309 = vmatpush.msra.mxu0 0.0
    %310 = vmatpush.msra.mxu0 0.0
    %311 = vmatpush.msra.mxu0 0.0
    %312 = vmatpush.msra.mxu0 %v41
    %313 = vmatpush.msra.mxu0 %v40
    %314 = vmatpush.msra.mxu0 %v39
    %315 = vmatpush.msra.mxu0 %v38
    %316 = vmatmul.f32.gmra.mxu0 %v298
    %v317 = vpop.f32.mrf.mxu0
    %v318 = vadd.f32 0.0, %v317
    %319 = vdwg.mxu0
    %v321 = vrot.slane %v318, 2
    %v322 = vrot.slane %v318, 3
    %v325 = vadd.f32 %v77, %v321
    %v326 = vadd.f32 %v80, %v322
    %v327 = vtanh.pop %v325
    %v328 = vtanh.pop %v326
    %v331 = vrot.slane %v327, 6
    %v332 = vrot.slane %v328, 5
    %v333 = vsel %vm118, %v332, %v331
    %v334 = vsel %vm83, %v333, 0
    %336 = vmatpush.msra.mxu0 0.0
    %337 = vmatpush.msra.mxu0 0.0
    %338 = vmatpush.msra.mxu0 0.0
    %339 = vmatpush.msra.mxu0 0.0
    %340 = vmatpush.msra.mxu0 0.0
    %341 = vmatpush.msra.mxu0 0.0
    %342 = vmatpush.msra.mxu0 0.0
    %343 = vmatpush.msra.mxu0 0.0
    %344 = vmatpush.msra.mxu0 0.0
    %345 = vmatpush.msra.mxu0 0.0
    %346 = vmatpush.msra.mxu0 0.0
    %347 = vmatpush.msra.mxu0 0.0
    %348 = vmatpush.msra.mxu0 %v41
    %349 = vmatpush.msra.mxu0 %v40
    %350 = vmatpush.msra.mxu0 %v39
    %351 = vmatpush.msra.mxu0 %v38
    %352 = vmatmul.f32.gmra.mxu0 %v334
    %v353 = vpop.f32.mrf.mxu0
    %v354 = vadd.f32 0.0, %v353
    %355 = vdwg.mxu0
    %v357 = vrot.slane %v354, 1
    %v358 = vrot.slane %v354, 2
    %v361 = vadd.f32 %v77, %v357
    %v362 = vadd.f32 %v80, %v358
    %v363 = vtanh.pop %v361
    %v364 = vtanh.pop %v362
    %366 = vrot.lane.b32.xlu0 %v153, 32
    %v367 = vpop.permute.xlu0 %366
    %369 = vrot.lane.b32.xlu0 %v189, 64
    %v370 = vpop.permute.xlu0 %369
    %372 = vrot.lane.b32.xlu0 %v225, 96
    %v373 = vpop.permute.xlu0 %372
    %376 = vrot.lane.b32.xlu0 %v297, 32
    %v377 = vpop.permute.xlu0 %376
    %379 = vrot.lane.b32.xlu0 %v333, 64
    %v380 = vpop.permute.xlu0 %379
    %v384 = vrot.slane %v363, 7
    %v385 = vrot.slane %v364, 6
    %v386 = vsel %vm118, %v385, %v384
    %387 = vrot.lane.b32.xlu0 %v386, 96
    %v388 = vpop.permute.xlu0 %387
    %v390 = vsel %vm83, %v119, %v367
    %vm391 = vcmask 523264
    %v392 = vsel %vm391, %v390, %v370
    %vm393 = vcmask 785408
    %v394 = vsel %vm393, %v392, %v373
    %v395 = vsel %vm83, %v261, %v377
    %v396 = vsel %vm391, %v395, %v380
    %v397 = vsel %vm393, %v396, %v388
    %v400 = vrot.slane %v397, 6
    %vm401 = vcmask 1041408
    %v402 = vsel %vm401, %v394, %v400
    %404 = vst [vmem:[#allocation5] sm:$0xf] %v402
    // Predicated region
    $region26: #{tpu_custom_call.1} parent=1 // pred_check
      _
    $region27: #{tpu_custom_call.1} parent=1 // pred_check_branch
      %406 = sbr.rel (0) target = $region29
    $region28: #{tpu_custom_call.1} parent=1 // pred_region
      %408 = vsyncadd [#allocation4], 0
      %s410 = sshll.u32 [#allocation5], 4
      %s411 = int_to_ptr.vmem [resolvable:$true] %s410
      %s412 = sshll.u32 %s5, 4
      %s413 = int_to_ptr.hbm [resolvable:$true] %s412
      %415 = dma.vmem_to_hbm [thread:$0]  %s411, 64, %s413, [#allocation4]
    $region29: #{tpu_custom_call.1} parent=1 // pred_fallthru
      _
    // Predicated region
    $region30: #{tpu_custom_call.1} parent=1 // pred_check
      _
    $region31: #{tpu_custom_call.1} parent=1 // pred_check_branch
      %417 = sbr.rel (0) target = $region33
    $region32: #{tpu_custom_call.1} parent=1 // pred_region
      %419 = dma.done [#allocation4], 64
    $region33: #{tpu_custom_call.1} parent=1 // pred_fallthru
      _
    %420 = vsyncpa [#allocation3], 1
    %421 = vsyncpa [#allocation4], 1

</llo_original>
